<compile_context>
chip_gen: v7x
topology: tpu7x:2x2x1
jax: 0.10.0
libtpu: 0.0.40
codegen_flags: <defaults>
</compile_context>

<pallas_src>
import functools

import jax
import jax.numpy as jnp
from jax.experimental import pallas as pl
from jax.experimental.pallas import tpu as pltpu

_TILE_BYTES = 4 << 20      # per-buffer x-tile byte budget
_MAX_LANE_TILE = 16384     # cap on lanes per grid step
_MAX_UNROLL_CHUNKS = 16    # cap on unrolled per-step accumulate statements


def _sublanes_for(dtype):
    # Native sublane packing: 8 (f32), 16 (bf16), 32 (int8/fp8).
    return max(8, 32 // jnp.dtype(dtype).itemsize)


def _pick_d_tile(width, rows, itemsize, tile_bytes=_TILE_BYTES):
    """Pick the lane-tile width for the reduction axis."""
    target = max(128, tile_bytes // max(1, rows * itemsize))
    # Single-step fast paths (block last dim == full array dim, no masking).
    if width <= 512 or (width % 128 == 0 and width <= min(target, 8192)):
        return width
    # Multi-step: power-of-two multiple of 128, within budget, capped.
    cap = min(target, _MAX_LANE_TILE, (width // 128) * 128)
    d_tile = 128
    while d_tile * 2 <= cap:
        d_tile *= 2
    return d_tile


def _acc_width(d_tile):
    """Width of the resident f32 accumulator (bounds the unrolled chunk count)."""
    if d_tile % 128 != 0:
        return d_tile                      # small single-step case
    aw = 128
    while d_tile // aw > _MAX_UNROLL_CHUNKS and d_tile % (aw * 2) == 0:
        aw *= 2
    return aw


def _x_spec(block_shape, index_map, n_buffers):
    """x BlockSpec, optionally with a deeper pipeline (guarded for older jax)."""
    if n_buffers > 2:
        try:
            return pl.BlockSpec(block_shape, index_map,
                                pipeline_mode=pl.Buffered(n_buffers))
        except Exception:  # pipeline_mode / Buffered unavailable -> default 2
            pass
    return pl.BlockSpec(block_shape, index_map)


def _make_kernel(width):
    """ReSPro squared-norm accumulation kernel (grid = (batch_blocks, k_steps))."""

    def kernel(coef_ref, x_ref, extra_ref, out_ref, acc_ref):
        # coef_ref  : SMEM (2,) f32          -> [alpha^2, 1/(2*alpha)]
        # x_ref     : VMEM (BT, DT) or (BT, S, DT) input tile
        # extra_ref : VMEM (BT, 1)           extra coordinate (resident over k)
        # out_ref   : VMEM (BT, 1)           output extra coord (resident over k)
        # acc_ref   : VMEM f32 (BT, AW) / (BT, S, AW) resident accumulator
        k = pl.program_id(1)
        d_tile = x_ref.shape[-1]
        aw = acc_ref.shape[-1]

        @pl.when(k == 0)
        def _init():
            acc_ref[...] = jnp.zeros_like(acc_ref)

        x = x_ref[...].astype(jnp.float32)
        if width % d_tile != 0:
            # Mask the ragged tail of the reduction axis (zero before squaring,
            # so garbage in the out-of-range lanes cannot propagate).
            valid = width - k * d_tile
            lane = jax.lax.broadcasted_iota(jnp.int32, x.shape, x.ndim - 1)
            x = jnp.where(lane < valid, x, 0.0)
        xsq = x * x

        # Per-step accumulation: pure VALU adds over 128-lane-aligned chunks
        # (no cross-lane / cross-sublane XLU work on the hot path).
        acc = acc_ref[...]
        for j in range(d_tile // aw):
            acc = acc + xsq[..., j * aw:(j + 1) * aw]
        acc_ref[...] = acc

        @pl.when(k == pl.num_programs(1) - 1)
        def _finalize():
            # Single XLU reduce (lanes, then sublanes for the packed layout).
            total = jnp.sum(acc_ref[...], axis=-1, keepdims=True)
            while total.ndim > 2:
                total = jnp.sum(total, axis=1)
            extra = extra_ref[...].astype(jnp.float32)
            out = (total + extra * coef_ref[0]) * coef_ref[1]
            out_ref[...] = out.astype(out_ref.dtype)

    return kernel


@jax.jit
def respro_forward(x, x_extra, alpha_upper, owner_alpha=None):
    """Pallas implementation of WrappedTorchReSPro.forward.

    Returns ((x, out_extra), new_alpha_upper), mirroring the PyTorch module.
    """
    batches = x.shape[0]
    x_flat = x.reshape(batches, -1)                 # free reshape, no copy
    d = x_flat.shape[1]
    itemsize = jnp.dtype(x_flat.dtype).itemsize
    sub = _sublanes_for(x_flat.dtype)

    # alpha coefficients, kept at f32 precision (do NOT truncate to x.dtype).
    alpha_src = alpha_upper if owner_alpha is None else owner_alpha
    alpha_f32 = jnp.asarray(alpha_src, dtype=jnp.float32).reshape(())
    coef = jnp.stack([alpha_f32 * alpha_f32, 0.5 / alpha_f32])   # SMEM scalars

    x_extra2 = jnp.asarray(x_extra).reshape(batches, 1)
    out_dtype = jnp.promote_types(x_flat.dtype, x_extra2.dtype)

    # ---- layout / tiling (all static, no padding) --------------------------
    if batches < sub and d % sub == 0:
        # Tiny batch: pack each row across `sub` sublanes (free bitcast reshape).
        width = d // sub
        x_in = x_flat.reshape(batches, sub, width)
        b_tile = batches
        rows = batches * sub
        d_tile = _pick_d_tile(width, rows, itemsize)
        x_block = (b_tile, sub, d_tile)
        x_index = lambda b, k: (0, 0, k)
        acc_shape = (b_tile, sub, _acc_width(d_tile))
    else:
        # Natural (B, D) layout: long contiguous DMA segments per row.
        width = d
        x_in = x_flat
        if batches <= 8:
            b_tile = batches
        else:
            b_tile = max(8, min(128, 8 * ((batches // 2) // 8)))
        rows = b_tile
        d_tile = _pick_d_tile(width, rows, itemsize)
        x_block = (b_tile, d_tile)
        x_index = lambda b, k: (b, k)
        acc_shape = (b_tile, _acc_width(d_tile))

    grid_b = -(-batches // b_tile)
    grid_k = -(-width // d_tile)
    n_buffers = 3 if grid_k >= 4 else 2     # deeper pipeline only for long grids

    out_extra = pl.pallas_call(
        _make_kernel(width),
        out_shape=jax.ShapeDtypeStruct((batches, 1), out_dtype),
        grid=(grid_b, grid_k),
        in_specs=[
            pl.BlockSpec(memory_space=pltpu.MemorySpace.SMEM),      # coef scalars
            _x_spec(x_block, x_index, n_buffers),                   # x tiles
            pl.BlockSpec((b_tile, 1), lambda b, k: (b, 0)),         # extra (resident)
        ],
        out_specs=pl.BlockSpec((b_tile, 1), lambda b, k: (b, 0)),   # out (resident)
        scratch_shapes=[pltpu.VMEM(acc_shape, jnp.float32)],
        compiler_params=pltpu.CompilerParams(
            dimension_semantics=("parallel", "arbitrary")),
        cost_estimate=pl.CostEstimate(
            flops=2 * batches * d,
            transcendentals=0,
            bytes_accessed=batches * d * itemsize + 8 * batches),
    )(coef, x_in, x_extra2)

    new_alpha_upper = jnp.asarray(1, dtype=jnp.asarray(alpha_upper).dtype)
    return (x, out_extra), new_alpha_upper


if __name__ == "__main__":
    key = jax.random.PRNGKey(0)

    def run_case(idx, shape, dtype, owner_alpha=None, rtol=1e-4, atol=1e-3):
        kx, ke = jax.random.split(jax.random.fold_in(key, idx))
        x = jax.random.normal(kx, shape, dtype=jnp.float32).astype(dtype)
        x_extra = jax.random.normal(ke, (shape[0], 1), dtype=jnp.float32).astype(dtype)
        alpha_upper = jnp.asarray(2.5, dtype=jnp.float32)

        (out_x, out_extra), new_alpha = respro_forward(x, x_extra, alpha_upper,
                                                       owner_alpha)
        jax.block_until_ready(out_extra)

        # Pure-JAX reference, mirrors the PyTorch forward (computed in f32).
        flat = x.reshape(shape[0], -1).astype(jnp.float32)
        alpha = jnp.float32(2.5) if owner_alpha is None else jnp.float32(owner_alpha)
        sqn = jnp.sum(flat * flat, axis=1, keepdims=True)
        ref = (sqn + x_extra.astype(jnp.float32) * alpha * alpha) / (2.0 * alpha)

        assert out_extra.shape == (shape[0], 1), (idx, out_extra.shape)
        assert jnp.allclose(out_extra.astype(jnp.float32), ref,
                            rtol=rtol, atol=atol), (idx, out_extra, ref)
        assert jnp.array_equal(out_x, x), idx
        assert float(new_alpha) == 1.0, idx

    # 1) tiny batch, packed layout, single step          (grid 1x1)
    run_case(1, (2, 4, 16, 16), jnp.float32)
    # 2) packed layout, multi-step reduction with ragged tail masking (grid 1x2)
    run_case(2, (2, 4, 40, 58), jnp.float32, owner_alpha=1.75)
    # 3) natural layout (D not a multiple of 8), ragged multi-step    (grid 1x2)
    run_case(3, (2, 1, 25, 30), jnp.float32)
    # 4) natural layout, multiple batch blocks with a partial last block (grid 2x1)
    run_case(4, (20, 2, 8, 8), jnp.float32)
    # 5) bf16 input: dtype-aware sublane packing (sub = 16), bf16 output
    run_case(5, (2, 4, 16, 16), jnp.bfloat16, rtol=3e-2, atol=1e-1)

    print("KERNEL_OK")
</pallas_src>

<mosaic_0001>
module attributes {stable_mosaic.version = 11 : i64} {
  func.func @kernel(%arg0: i32, %arg1: i32, %arg2: memref<2xf32, #tpu.memory_space<smem>>, %arg3: memref<2x8x128xf32, #tpu.memory_space<vmem>>, %arg4: memref<2x1xf32, #tpu.memory_space<vmem>>, %arg5: memref<2x1xf32, #tpu.memory_space<vmem>>, %arg6: memref<2x8x128xf32, #tpu.memory_space<vmem>>) attributes {dimension_semantics = [#tpu.dimension_semantics<parallel>, #tpu.dimension_semantics<arbitrary>], iteration_bounds = array<i64: 1, 1>, scalar_prefetch = 0 : i64, scratch_operands = 1 : i64, tpu.core_type = #tpu.core_type<tc>, window_params = [{transform_indices = @transform_0, window_bounds = array<i64: 2>}, {transform_indices = @transform_1, window_bounds = array<i64: 2, 8, 128>}, {transform_indices = @transform_2, window_bounds = array<i64: 2, 1>}, {transform_indices = @transform_3, window_bounds = array<i64: 2, 1>}]} {
    %c0_i32 = arith.constant 0 : i32
    %0 = arith.cmpi eq, %arg1, %c0_i32 : i32
    %1 = arith.extui %0 : i1 to i32
    %c0_i32_0 = arith.constant 0 : i32
    %2 = arith.cmpi ne, %1, %c0_i32_0 : i32
    scf.if %2 {
      %cst = arith.constant 0.000000e+00 : f32
      %11 = vector.broadcast %cst : f32 to vector<2x8x128xf32>
      %c0_11 = arith.constant 0 : index
      %c0_12 = arith.constant 0 : index
      %c0_13 = arith.constant 0 : index
      %12 = vector.load %arg6[%c0_11, %c0_12, %c0_13] : memref<2x8x128xf32, #tpu.memory_space<vmem>>, vector<2x8x128xf32>
      tpu.vector_store %arg6[%c0_11, %c0_12, %c0_13], %11 {strides = array<i32>} : memref<2x8x128xf32, #tpu.memory_space<vmem>>, vector<2x8x128xf32>,
    } else {
    }
    %c0 = arith.constant 0 : index
    %c0_1 = arith.constant 0 : index
    %c0_2 = arith.constant 0 : index
    %3 = vector.load %arg3[%c0, %c0_1, %c0_2] : memref<2x8x128xf32, #tpu.memory_space<vmem>>, vector<2x8x128xf32>
    %4 = arith.mulf %3, %3 : vector<2x8x128xf32>
    %c0_3 = arith.constant 0 : index
    %c0_4 = arith.constant 0 : index
    %c0_5 = arith.constant 0 : index
    %5 = vector.load %arg6[%c0_3, %c0_4, %c0_5] : memref<2x8x128xf32, #tpu.memory_space<vmem>>, vector<2x8x128xf32>
    %6 = arith.addf %5, %4 : vector<2x8x128xf32>
    %c0_6 = arith.constant 0 : index
    %c0_7 = arith.constant 0 : index
    %c0_8 = arith.constant 0 : index
    %7 = vector.load %arg6[%c0_6, %c0_7, %c0_8] : memref<2x8x128xf32, #tpu.memory_space<vmem>>, vector<2x8x128xf32>
    tpu.vector_store %arg6[%c0_6, %c0_7, %c0_8], %6 {strides = array<i32>} : memref<2x8x128xf32, #tpu.memory_space<vmem>>, vector<2x8x128xf32>,
    %c0_i32_9 = arith.constant 0 : i32
    %8 = arith.cmpi eq, %arg1, %c0_i32_9 : i32
    %9 = arith.extui %8 : i1 to i32
    %c0_i32_10 = arith.constant 0 : i32
    %10 = arith.cmpi ne, %9, %c0_i32_10 : i32
    scf.if %10 {
      %c0_11 = arith.constant 0 : index
      %c0_12 = arith.constant 0 : index
      %c0_13 = arith.constant 0 : index
      %11 = vector.load %arg6[%c0_11, %c0_12, %c0_13] : memref<2x8x128xf32, #tpu.memory_space<vmem>>, vector<2x8x128xf32>
      %cst = arith.constant dense<0.000000e+00> : vector<2x8xf32>
      %12 = vector.multi_reduction <add>, %11, %cst [2] : vector<2x8x128xf32> to vector<2x8xf32>
      %13 = vector.shape_cast %12 : vector<2x8xf32> to vector<2x8x1xf32>
      %cst_14 = arith.constant dense<0.000000e+00> : vector<2x1xf32>
      %14 = vector.multi_reduction <add>, %13, %cst_14 [1] : vector<2x8x1xf32> to vector<2x1xf32>
      %c0_15 = arith.constant 0 : index
      %c0_16 = arith.constant 0 : index
      %15 = vector.load %arg4[%c0_15, %c0_16] : memref<2x1xf32, #tpu.memory_space<vmem>>, vector<2x1xf32>
      %c0_17 = arith.constant 0 : index
      %16 = memref.load %arg2[%c0_17] : memref<2xf32, #tpu.memory_space<smem>>
      %17 = vector.broadcast %16 : f32 to vector<2x1xf32>
      %18 = arith.mulf %15, %17 : vector<2x1xf32>
      %19 = arith.addf %14, %18 : vector<2x1xf32>
      %c1 = arith.constant 1 : index
      %20 = memref.load %arg2[%c1] : memref<2xf32, #tpu.memory_space<smem>>
      %21 = vector.broadcast %20 : f32 to vector<2x1xf32>
      %22 = arith.mulf %19, %21 : vector<2x1xf32>
      %c0_18 = arith.constant 0 : index
      %c0_19 = arith.constant 0 : index
      %23 = vector.load %arg5[%c0_18, %c0_19] : memref<2x1xf32, #tpu.memory_space<vmem>>, vector<2x1xf32>
      tpu.vector_store %arg5[%c0_18, %c0_19], %22 {strides = array<i32>} : memref<2x1xf32, #tpu.memory_space<vmem>>, vector<2x1xf32>,
    } else {
    }
    return
  }
  func.func @transform_0(%arg0: i32, %arg1: i32) -> i32 {
    %c0_i32 = arith.constant 0 : i32
    %c0_i32_0 = arith.constant 0 : i32
    return %c0_i32 : i32
  }
  func.func @transform_1(%arg0: i32, %arg1: i32) -> (i32, i32, i32) {
    %c0_i32 = arith.constant 0 : i32
    %c0_i32_0 = arith.constant 0 : i32
    %c0_i32_1 = arith.constant 0 : i32
    return %c0_i32, %c0_i32_0, %arg1 : i32, i32, i32
  }
  func.func @transform_2(%arg0: i32, %arg1: i32) -> (i32, i32) {
    %c0_i32 = arith.constant 0 : i32
    %c0_i32_0 = arith.constant 0 : i32
    return %arg0, %c0_i32 : i32, i32
  }
  func.func @transform_3(%arg0: i32, %arg1: i32) -> (i32, i32) {
    %c0_i32 = arith.constant 0 : i32
    %c0_i32_0 = arith.constant 0 : i32
    return %arg0, %c0_i32 : i32, i32
  }
}

</mosaic_0001>

<llo_original>
// kernel: respro_forward.1
$region0: #{respro_forward.1}
  #allocation0 [shape = 'u32[]', space=smem, size = 0x4, offset = 0x4, fixed_abs, tag = 'smem constant byte address 0x4 - core index']
  #allocation1 [shape = 'u32[144,128]{1,0:T(1,128)}', space=vmem, size = 0x12000, scoped, tag = 'internal scratch']
  #allocation2 [shape = 'f32[2,8,128]{2,1,0:T(8,128)}', space=vmem, size = 0x2000, scoped, tag = 'scratch operand']
  %s0 = inlined_call_operand.vmem [shape: f32[2], index: 0, kind: input, shape index: {}]
  %s1 = inlined_call_operand.vmem [shape: f32[2,8,128], index: 1, kind: input, shape index: {}]
  %s2 = inlined_call_operand.vmem [shape: f32[2,1], index: 2, kind: input, shape index: {}]
  %s3 = inlined_call_operand.vmem [shape: f32[2,1], index: 3, kind: output, shape index: {}]
  %s4 = sld [smem:[#allocation0]]
  $region34: #{respro_forward.1} parent=0
    _
  %s6 = ssub.s32 1, %s4
  %s7 = scalar_select 0, %s6, %s4
  $region1: #{respro_forward.1} parent=0
    #allocation3 [shape = 'u8[512]{0}', space=smem, size = 0x200, scoped, tag = 'input window, operand 0, single buffered']
    #allocation4 [shape = 's32[1]{0}', space=sflag, size = 0x4, scoped, tag = 'scoped memory for respro_forward.1']
    %8 = vsyncpa [#allocation4], 0
    // Predicated region
    $region2: #{respro_forward.1} parent=1 // pred_check
      _
    $region3: #{respro_forward.1} parent=1 // pred_check_branch
      %10 = sbr.rel (0) target = $region5
    $region4: #{respro_forward.1} parent=1 // pred_region
      %s12 = ssub.s32 16, 16
      %13 = vsyncadd [#allocation4], %s12
      %s15 = sshll.u32 %s0, 4
      %s16 = int_to_ptr.vmem [resolvable:$true] %s15
      %18 = dma.vmem_to_smem %s16, 16, [#allocation3], [#allocation4]
    $region5: #{respro_forward.1} parent=1 // pred_fallthru
      _
    // Predicated region
    $region6: #{respro_forward.1} parent=1 // pred_check
      _
    $region7: #{respro_forward.1} parent=1 // pred_check_branch
      %20 = sbr.rel (0) target = $region9
    $region8: #{respro_forward.1} parent=1 // pred_region
      _
    $region9: #{respro_forward.1} parent=1 // pred_fallthru
      _
    // Predicated region
    $region10: #{respro_forward.1} parent=1 // pred_check
      _
    $region11: #{respro_forward.1} parent=1 // pred_check_branch
      %22 = sbr.rel (0) target = $region13
    $region12: #{respro_forward.1} parent=1 // pred_region
      _
    $region13: #{respro_forward.1} parent=1 // pred_fallthru
      _
    // Predicated region
    $region14: #{respro_forward.1} parent=1 // pred_check
      _
    $region15: #{respro_forward.1} parent=1 // pred_check_branch
      %24 = sbr.rel (0) target = $region17
    $region16: #{respro_forward.1} parent=1 // pred_region
      %25 = dma.done [#allocation4], 16
    $region17: #{respro_forward.1} parent=1 // pred_fallthru
      _
    %26 = sfence
    %p27 = scmp.eq.s32.totalorder 0, 0
    // Predicated region
    $region18: #{respro_forward.1} parent=1 // pred_check
      %p28 = pneg %p27
    $region19: #{respro_forward.1} parent=1 // pred_check_branch
      %30 = sbr.rel (%p28) target = $region21
    $region20: #{respro_forward.1} parent=1 // pred_region
      %31 = vst [vmem:[#allocation2] sm:$0xff] 0.0
      %32 = vst [vmem:[#allocation2 + $0x8] sm:$0xff] 0.0
    $region21: #{respro_forward.1} parent=1 // pred_fallthru
      _
    %v33 = vld [vmem:[%s1] sm:$0xff]
    %v34 = vld [vmem:[%s1 + $0x8] sm:$0xff]
    %v35 = vmul.f32 %v33, %v33
    %v36 = vmul.f32 %v34, %v34
    %v37 = vld [vmem:[#allocation2] sm:$0xff]
    %v38 = vld [vmem:[#allocation2 + $0x8] sm:$0xff]
    %v39 = vadd.f32 %v37, %v35
    %v40 = vadd.f32 %v38, %v36
    %41 = vst [vmem:[#allocation2] sm:$0xff] %v39
    %42 = vst [vmem:[#allocation2 + $0x8] sm:$0xff] %v40
    // Predicated region
    $region22: #{respro_forward.1} parent=1 // pred_check
      %p43 = pneg %p27
    $region23: #{respro_forward.1} parent=1 // pred_check_branch
      %45 = sbr.rel (%p43) target = $region25
    $region24: #{respro_forward.1} parent=1 // pred_region
      %v46 = vld [vmem:[#allocation2] sm:$0xff]
      %v47 = vld [vmem:[#allocation2 + $0x8] sm:$0xff]
      %48 = vadd.xlane.f32.xlu0 %v46
      %v49 = vpop.xlane.xlu0 %48
      %50 = vadd.xlane.f32.xlu0 %v47
      %v51 = vpop.xlane.xlu0 %50
      %v52 = vrot.slane %v49, 4
      %v53 = vadd.f32 %v49, %v52
      %v54 = vrot.slane %v53, 2
      %v55 = vadd.f32 %v53, %v54
      %v56 = vrot.slane %v55, 1
      %v57 = vadd.f32 %v55, %v56
      %v58 = vrot.slane %v51, 4
      %v59 = vadd.f32 %v51, %v58
      %v60 = vrot.slane %v59, 2
      %v61 = vadd.f32 %v59, %v60
      %v62 = vrot.slane %v61, 1
      %v63 = vadd.f32 %v61, %v62
      %v64 = vld [vmem:[%s2] sm:$0x3]
      %s65 = sld [smem:[#allocation3]]
      %v66 = vstv %s65
      %v67 = vmul.f32 %v64, %v66
      %v69 = vrot.slane %v67, 1
      %v72 = vadd.f32 %v57, %v67
      %v73 = vadd.f32 %v63, %v69
      %s74 = sld [smem:[#allocation3 + $0x1]]
      %v75 = vstv %s74
      %v76 = vmul.f32 %v72, %v75
      %v77 = vmul.f32 %v73, %v75
      %v80 = vrot.slane %v77, 7
      %vm81 = vcmask 1041409
      %v82 = vsel %vm81, %v80, %v76
      %vm84 = vcmask 1024
      %85 = vst.msk [vmem:[%s3] sm:$0x3] %vm84, %v82
    $region25: #{respro_forward.1} parent=1 // pred_fallthru
      _
    // Predicated region
    $region26: #{respro_forward.1} parent=1 // pred_check
      _
    $region27: #{respro_forward.1} parent=1 // pred_check_branch
      %87 = sbr.rel (0) target = $region29
    $region28: #{respro_forward.1} parent=1 // pred_region
      _
    $region29: #{respro_forward.1} parent=1 // pred_fallthru
      _
    // Predicated region
    $region30: #{respro_forward.1} parent=1 // pred_check
      _
    $region31: #{respro_forward.1} parent=1 // pred_check_branch
      %89 = sbr.rel (0) target = $region33
    $region32: #{respro_forward.1} parent=1 // pred_region
      _
    $region33: #{respro_forward.1} parent=1 // pred_fallthru
      _
    %90 = vsyncpa [#allocation4], 1

</llo_original>
